<compile_context>
chip_gen: v6e
topology: v6e:2x2x1
jax: 0.10.0
libtpu: 0.0.40
codegen_flags: <defaults>
</compile_context>

<pallas_src>
import functools
import math

import jax
import jax.numpy as jnp
import numpy as np
from jax.experimental import pallas as pl
from jax.experimental.pallas import tpu as pltpu

_LOG_2PI = math.log(2.0 * math.pi)


# ---------------------------------------------------------------------------
# In-kernel special functions (recurrence shift by 8 + asymptotic series).
# Shift sums are evaluated as grouped rationals: only 2-3 EUP divides + 1-2 logs
# per call instead of 8-10 EUP ops.
# ---------------------------------------------------------------------------
def _shift_products(x):
    """Pair products (x+2k)(x+2k+1) for k=0..3 and the two grouped products."""
    q = [(x + float(k)) * (x + float(k + 1)) for k in range(0, 8, 2)]
    p_lo = q[0] * q[1]          # x(x+1)(x+2)(x+3)
    p_hi = q[2] * q[3]          # (x+4)(x+5)(x+6)(x+7)
    return q, p_lo, p_hi


def _pair_inverses(q, p_lo, p_hi):
    """1/q_k for the four pair products using only two divides."""
    inv_lo = 1.0 / p_lo
    inv_hi = 1.0 / p_hi
    return (q[1] * inv_lo, q[0] * inv_lo, q[3] * inv_hi, q[2] * inv_hi)


def _lgamma_digamma(x):
    """Fused (lgamma(x), digamma(x)) for x > 0.  EUP cost: 2 logs + 3 divides."""
    q, p_lo, p_hi = _shift_products(x)
    inv_q = _pair_inverses(q, p_lo, p_hi)

    # digamma shift: sum_{k=0..7} 1/(x+k); pairs combined as (2x+4k+1)/q_k
    two_x = x + x
    dig_shift = ((two_x + 1.0) * inv_q[0] + (two_x + 5.0) * inv_q[1]
                 + (two_x + 9.0) * inv_q[2] + (two_x + 13.0) * inv_q[3])
    # lgamma shift: sum_{k=0..7} log(x+k) = log(prod) -- a single log
    lg_shift = jnp.log(p_lo * p_hi)

    z = x + 8.0
    inv = 1.0 / z
    inv2 = inv * inv
    logz = jnp.log(z)
    lgamma = ((z - 0.5) * logz - z + 0.5 * _LOG_2PI
              + inv * (1.0 / 12.0 - inv2 * (1.0 / 360.0 - inv2 * (1.0 / 1260.0)))
              - lg_shift)
    digamma = (logz - 0.5 * inv
               - inv2 * (1.0 / 12.0 - inv2 * (1.0 / 120.0 - inv2 * (1.0 / 252.0)))
               - dig_shift)
    return lgamma, digamma


def _trigamma(x):
    """trigamma(x) for x > 0.  EUP cost: 3 divides, no logs."""
    q, p_lo, p_hi = _shift_products(x)
    inv_q = _pair_inverses(q, p_lo, p_hi)

    # 1/a^2 + 1/b^2 = (a^2 + b^2) * (1/(ab))^2  with ab = q_k
    shift = jnp.zeros_like(x)
    for k in range(4):
        a = x + float(2 * k)
        b = x + float(2 * k + 1)
        shift = shift + (a * a + b * b) * (inv_q[k] * inv_q[k])

    z = x + 8.0
    inv = 1.0 / z
    inv2 = inv * inv
    asym = (inv + 0.5 * inv2
            + inv2 * inv * (1.0 / 6.0 - inv2 * (1.0 / 30.0
                                                - inv2 * (1.0 / 42.0 - inv2 / 30.0))))
    return asym + shift


# ---------------------------------------------------------------------------
# Pallas kernel: per-tile, per-sample evidential loss.  Pure map over the grid
# (no resident accumulator), so the grid axis is fully parallel.
# ---------------------------------------------------------------------------
def _evidential_kernel(logits_ref, targets_ref, out_ref, *, class_axis,
                       nb_classes, activation, add_constant, kl_coef, ref_coef,
                       fisher_coef, loss_type, lgamma_refc, lgamma_ref):
    ca = class_axis                              # axis carrying the classes
    x = logits_ref[...].astype(jnp.float32)

    # ---- alphas = activation(logits) + add_constant  (ToProbs, return_probs=False)
    if activation == "relu":
        evidence = jnp.maximum(x, 0.0)
    elif activation == "exp":
        evidence = jnp.exp(x)
    else:  # softplus (default)
        evidence = jnp.maximum(x, 0.0) + jnp.log(1.0 + jnp.exp(-jnp.abs(x)))
    alphas = evidence + jnp.float32(add_constant)

    # ---- one-hot targets built in-kernel (equivalent of scatter_)
    cls = jax.lax.broadcasted_iota(jnp.int32, x.shape, ca)
    t = targets_ref[...]                          # (1, tn) or (tn, 1) int32
    t1h = (cls == t).astype(jnp.float32)

    a0 = jnp.sum(alphas, axis=ca, keepdims=True)  # per-sample
    inv_a0 = 1.0 / a0
    inv_a0p1 = 1.0 / (a0 + 1.0)

    # ---- MSE (Bayes-risk) term
    p_hat = alphas * inv_a0
    mse = (alphas * (a0 - alphas) * (inv_a0 * inv_a0 * inv_a0p1)
           + (t1h - p_hat) ** 2)
    if loss_type == "IEDL":
        tri_a = _trigamma(alphas)
        mse = mse * tri_a
    per_sample = jnp.sum(mse, axis=ca, keepdims=True)

    # ---- KL( Dir(alpha_hat) || Dir(ref_coef) )
    if kl_coef is not None:
        a_hat = alphas * (1.0 - t1h) + jnp.float32(ref_coef) * t1h
        a_hat0 = jnp.sum(a_hat, axis=ca, keepdims=True)
        lg_ah, dg_ah = _lgamma_digamma(a_hat)
        lg_ah0, dg_ah0 = _lgamma_digamma(a_hat0)
        kl = (lg_ah0
              - jnp.float32(lgamma_refc)
              + jnp.float32(nb_classes * lgamma_ref)
              - jnp.sum(lg_ah, axis=ca, keepdims=True)
              + jnp.sum((a_hat - jnp.float32(ref_coef)) * (dg_ah - dg_ah0),
                        axis=ca, keepdims=True))
        per_sample = per_sample + jnp.float32(kl_coef) * kl

    # ---- Fisher information term (IEDL only)
    if (fisher_coef is not None) and (loss_type == "IEDL"):
        tri_a0 = _trigamma(a0)
        inv_tri_a = 1.0 / tri_a
        f_info = (jnp.sum(jnp.log(tri_a), axis=ca, keepdims=True)
                  + jnp.log(1.0 - jnp.sum(tri_a0 * inv_tri_a,
                                          axis=ca, keepdims=True)))
        per_sample = per_sample - jnp.float32(fisher_coef) * f_info

    out_ref[...] = per_sample


# ---------------------------------------------------------------------------
# Wrapper: layout selection, tiling, padding, final reduction.
# ---------------------------------------------------------------------------
def _choose_tile_n(n, c, transposed, tile_n):
    target_elems = 256 * 1024          # ~1 MiB of f32 per input tile
    if transposed:
        unit, cap = 128, 8192          # batch on lanes: multiple of 128
    else:
        unit, cap = 8, 4096            # batch on sublanes: multiple of 8
    if tile_n is None:
        tile_n = max(unit, min(cap, target_elems // max(c, 1)))
    tile_n = max(unit, (int(tile_n) // unit) * unit)
    n_ceil = ((n + unit - 1) // unit) * unit
    return min(tile_n, n_ceil)


def evidential_loss(logits, targets, *, loss_type="IEDL", kl_coef=0.5,
                    ref_coef=1.0, fisher_coef=0.01, add_constant=1.0,
                    activation_fct="softplus", reduction="mean",
                    epoch=None, epoch_update=False, tile_n=None):
    assert ref_coef > 0
    n, c = logits.shape
    loss_type = loss_type.upper()
    if epoch_update and (epoch is not None) and (kl_coef is None):
        kl_coef = min(1.0, epoch / 10.0)

    # Lane-dense layout for small class counts: classes on sublanes, batch on lanes.
    transposed = c < 128
    tile_n = _choose_tile_n(n, c, transposed, tile_n)
    n_pad = ((n + tile_n - 1) // tile_n) * tile_n
    grid = (n_pad // tile_n,)

    pad = n_pad - n
    if pad:
        logits = jnp.pad(logits, ((0, pad), (0, 0)))
        targets = jnp.pad(targets, ((0, pad),))
    targets = targets.astype(jnp.int32)

    kernel = functools.partial(
        _evidential_kernel,
        class_axis=0 if transposed else 1,
        nb_classes=c,
        activation=activation_fct.lower(),
        add_constant=float(add_constant),
        kl_coef=None if kl_coef is None else float(kl_coef),
        ref_coef=float(ref_coef),
        fisher_coef=None if fisher_coef is None else float(fisher_coef),
        loss_type=loss_type,
        lgamma_refc=math.lgamma(ref_coef * c),
        lgamma_ref=math.lgamma(ref_coef))

    if transposed:
        logits_in = logits.T                       # (C, n_pad): batch on lanes
        targets_in = targets.reshape(1, n_pad)
        in_specs = [pl.BlockSpec((c, tile_n), lambda i: (0, i)),
                    pl.BlockSpec((1, tile_n), lambda i: (0, i))]
        out_spec = pl.BlockSpec((1, tile_n), lambda i: (0, i))
        out_shape = jax.ShapeDtypeStruct((1, n_pad), jnp.float32)
    else:
        logits_in = logits                         # (n_pad, C): classes on lanes
        targets_in = targets.reshape(n_pad, 1)
        in_specs = [pl.BlockSpec((tile_n, c), lambda i: (i, 0)),
                    pl.BlockSpec((tile_n, 1), lambda i: (i, 0))]
        out_spec = pl.BlockSpec((tile_n, 1), lambda i: (i, 0))
        out_shape = jax.ShapeDtypeStruct((n_pad, 1), jnp.float32)

    # Double-buffered input + ~12 live f32 intermediates of tile size.
    tile_bytes = tile_n * c * 4
    vmem_limit = min(64 * 1024 * 1024, max(32 * 1024 * 1024, 14 * tile_bytes))

    per_sample = pl.pallas_call(
        kernel,
        out_shape=out_shape,
        grid_spec=pltpu.PrefetchScalarGridSpec(
            num_scalar_prefetch=0,
            grid=grid,
            in_specs=in_specs,
            out_specs=out_spec),
        compiler_params=pltpu.CompilerParams(
            dimension_semantics=("parallel",),
            vmem_limit_bytes=int(vmem_limit)),
    )(logits_in, targets_in)

    per_sample = per_sample.reshape(-1)[:n]        # drop padded rows
    return per_sample.mean() if reduction == "mean" else per_sample.sum()


# ---------------------------------------------------------------------------
# Pure-JAX reference (mirrors the PyTorch forward) for validation.
# ---------------------------------------------------------------------------
def reference_loss(logits, targets, *, loss_type="IEDL", kl_coef=0.5,
                   ref_coef=1.0, fisher_coef=0.01, add_constant=1.0):
    from jax.scipy.special import gammaln, digamma, polygamma
    logits = logits.astype(jnp.float32)
    n, c = logits.shape
    alphas = jax.nn.softplus(logits) + add_constant
    t1h = jax.nn.one_hot(targets, c, dtype=jnp.float32)

    a0 = jnp.sum(alphas, -1, keepdims=True)
    mse = alphas * (a0 - alphas) / ((a0 + 1.0) * a0 ** 2) + (t1h - alphas / a0) ** 2
    if loss_type.upper() == "IEDL":
        mse = mse * polygamma(1, alphas)
    total = jnp.sum(mse, -1).mean()

    if kl_coef is not None:
        a_hat = alphas * (1.0 - t1h) + ref_coef * t1h
        a_hat0 = jnp.sum(a_hat, -1, keepdims=True)
        kl = (gammaln(a_hat0) - gammaln(jnp.float32(ref_coef * c))
              + c * gammaln(jnp.float32(ref_coef))
              - jnp.sum(gammaln(a_hat), -1, keepdims=True)
              + jnp.sum((a_hat - ref_coef) * (digamma(a_hat) - digamma(a_hat0)),
                        -1, keepdims=True))
        total = total + kl_coef * kl.mean()

    if (fisher_coef is not None) and (loss_type.upper() == "IEDL"):
        pg_a = polygamma(1, alphas)
        pg_a0 = polygamma(1, a0)
        f = jnp.sum(jnp.log(pg_a), -1) + jnp.log(1.0 - jnp.sum(pg_a0 / pg_a, -1))
        total = total - fisher_coef * f.mean()
    return total


if __name__ == "__main__":
    key = jax.random.PRNGKey(0)

    checks = [
        # (N, C, loss_type, kl_coef, fisher_coef)
        (16, 8,   "IEDL", 0.5,  0.01),   # small-C lane-dense (transposed) path
        (16, 256, "IEDL", 0.5,  0.01),   # large-C row-major path
        (16, 8,   "EDL",  None, None),   # MSE-only branch
    ]
    for idx, (n, c, lt, klc, fc) in enumerate(checks):
        k1, k2 = jax.random.split(jax.random.fold_in(key, idx))
        logits = jax.random.normal(k1, (n, c), dtype=jnp.float32)
        targets = jax.random.randint(k2, (n,), 0, c, dtype=jnp.int32)

        got = evidential_loss(logits, targets, loss_type=lt, kl_coef=klc,
                              ref_coef=1.0, fisher_coef=fc, add_constant=1.0)
        got = jax.block_until_ready(got)

        want = reference_loss(logits, targets, loss_type=lt, kl_coef=klc,
                              ref_coef=1.0, fisher_coef=fc, add_constant=1.0)
        np.testing.assert_allclose(np.asarray(got), np.asarray(want),
                                   rtol=1e-3, atol=1e-3)

    print("KERNEL_OK")
</pallas_src>

<mosaic_0001>
module attributes {stable_mosaic.version = 11 : i64} {
  func.func @_evidential_kernel(%arg0: i32, %arg1: memref<8x128xf32, #tpu.memory_space<vmem>>, %arg2: memref<1x128xi32, #tpu.memory_space<vmem>>, %arg3: memref<1x128xf32, #tpu.memory_space<vmem>>) attributes {dimension_semantics = [#tpu.dimension_semantics<parallel>], iteration_bounds = array<i64: 1>, scalar_prefetch = 0 : i64, scratch_operands = 0 : i64, tpu.core_type = #tpu.core_type<tc>, window_params = [{transform_indices = @transform_0, window_bounds = array<i64: 8, 128>}, {transform_indices = @transform_1, window_bounds = array<i64: 1, 128>}, {transform_indices = @transform_2, window_bounds = array<i64: 1, 128>}]} {
    %c0 = arith.constant 0 : index
    %c0_0 = arith.constant 0 : index
    %0 = vector.load %arg1[%c0, %c0_0] : memref<8x128xf32, #tpu.memory_space<vmem>>, vector<8x128xf32>
    %cst = arith.constant 0.000000e+00 : f32
    %1 = vector.broadcast %cst : f32 to vector<8x128xf32>
    %2 = arith.maximumf %0, %1 : vector<8x128xf32>
    %3 = math.absf %0 : vector<8x128xf32>
    %cst_1 = arith.constant 0.000000e+00 : f32
    %4 = vector.broadcast %cst_1 : f32 to vector<8x128xf32>
    %5 = arith.subf %4, %3 : vector<8x128xf32>
    %6 = math.exp %5 : vector<8x128xf32>
    %cst_2 = arith.constant 1.000000e+00 : f32
    %7 = vector.broadcast %cst_2 : f32 to vector<8x128xf32>
    %8 = arith.addf %7, %6 : vector<8x128xf32>
    %9 = math.log %8 : vector<8x128xf32>
    %10 = arith.addf %2, %9 : vector<8x128xf32>
    %cst_3 = arith.constant 1.000000e+00 : f32
    %11 = vector.broadcast %cst_3 : f32 to vector<8x128xf32>
    %12 = arith.addf %10, %11 : vector<8x128xf32>
    %13 = tpu.iota {dimensions = array<i32: 0>} : vector<8x128xi32>
    %c0_4 = arith.constant 0 : index
    %c0_5 = arith.constant 0 : index
    %14 = vector.load %arg2[%c0_4, %c0_5] : memref<1x128xi32, #tpu.memory_space<vmem>>, vector<1x128xi32>
    %15 = vector.broadcast %14 : vector<1x128xi32> to vector<8x128xi32>
    %16 = arith.cmpi eq, %13, %15 : vector<8x128xi32>
    %17 = arith.extui %16 : vector<8x128xi1> to vector<8x128xi32>
    %18 = arith.sitofp %17 : vector<8x128xi32> to vector<8x128xf32>
    %cst_6 = arith.constant dense<0.000000e+00> : vector<128xf32>
    %19 = vector.multi_reduction <add>, %12, %cst_6 [0] : vector<8x128xf32> to vector<128xf32>
    %20 = vector.shape_cast %19 : vector<128xf32> to vector<1x128xf32>
    %cst_7 = arith.constant 1.000000e+00 : f32
    %21 = vector.broadcast %cst_7 : f32 to vector<1x128xf32>
    %22 = arith.divf %21, %20 : vector<1x128xf32>
    %cst_8 = arith.constant 1.000000e+00 : f32
    %23 = vector.broadcast %cst_8 : f32 to vector<1x128xf32>
    %24 = arith.addf %20, %23 : vector<1x128xf32>
    %cst_9 = arith.constant 1.000000e+00 : f32
    %25 = vector.broadcast %cst_9 : f32 to vector<1x128xf32>
    %26 = arith.divf %25, %24 : vector<1x128xf32>
    %27 = vector.broadcast %22 : vector<1x128xf32> to vector<8x128xf32>
    %28 = arith.mulf %12, %27 : vector<8x128xf32>
    %29 = vector.broadcast %20 : vector<1x128xf32> to vector<8x128xf32>
    %30 = arith.subf %29, %12 : vector<8x128xf32>
    %31 = arith.mulf %12, %30 : vector<8x128xf32>
    %32 = arith.mulf %22, %22 : vector<1x128xf32>
    %33 = arith.mulf %32, %26 : vector<1x128xf32>
    %34 = vector.broadcast %33 : vector<1x128xf32> to vector<8x128xf32>
    %35 = arith.mulf %31, %34 : vector<8x128xf32>
    %36 = arith.subf %18, %28 : vector<8x128xf32>
    %37 = arith.mulf %36, %36 : vector<8x128xf32>
    %38 = arith.addf %35, %37 : vector<8x128xf32>
    %cst_10 = arith.constant 0.000000e+00 : f32
    %39 = vector.broadcast %cst_10 : f32 to vector<8x128xf32>
    %40 = arith.addf %12, %39 : vector<8x128xf32>
    %cst_11 = arith.constant 1.000000e+00 : f32
    %41 = vector.broadcast %cst_11 : f32 to vector<8x128xf32>
    %42 = arith.addf %12, %41 : vector<8x128xf32>
    %43 = arith.mulf %40, %42 : vector<8x128xf32>
    %cst_12 = arith.constant 2.000000e+00 : f32
    %44 = vector.broadcast %cst_12 : f32 to vector<8x128xf32>
    %45 = arith.addf %12, %44 : vector<8x128xf32>
    %cst_13 = arith.constant 3.000000e+00 : f32
    %46 = vector.broadcast %cst_13 : f32 to vector<8x128xf32>
    %47 = arith.addf %12, %46 : vector<8x128xf32>
    %48 = arith.mulf %45, %47 : vector<8x128xf32>
    %cst_14 = arith.constant 4.000000e+00 : f32
    %49 = vector.broadcast %cst_14 : f32 to vector<8x128xf32>
    %50 = arith.addf %12, %49 : vector<8x128xf32>
    %cst_15 = arith.constant 5.000000e+00 : f32
    %51 = vector.broadcast %cst_15 : f32 to vector<8x128xf32>
    %52 = arith.addf %12, %51 : vector<8x128xf32>
    %53 = arith.mulf %50, %52 : vector<8x128xf32>
    %cst_16 = arith.constant 6.000000e+00 : f32
    %54 = vector.broadcast %cst_16 : f32 to vector<8x128xf32>
    %55 = arith.addf %12, %54 : vector<8x128xf32>
    %cst_17 = arith.constant 7.000000e+00 : f32
    %56 = vector.broadcast %cst_17 : f32 to vector<8x128xf32>
    %57 = arith.addf %12, %56 : vector<8x128xf32>
    %58 = arith.mulf %55, %57 : vector<8x128xf32>
    %59 = arith.mulf %43, %48 : vector<8x128xf32>
    %60 = arith.mulf %53, %58 : vector<8x128xf32>
    %cst_18 = arith.constant 1.000000e+00 : f32
    %61 = vector.broadcast %cst_18 : f32 to vector<8x128xf32>
    %62 = arith.divf %61, %59 : vector<8x128xf32>
    %cst_19 = arith.constant 1.000000e+00 : f32
    %63 = vector.broadcast %cst_19 : f32 to vector<8x128xf32>
    %64 = arith.divf %63, %60 : vector<8x128xf32>
    %65 = arith.mulf %48, %62 : vector<8x128xf32>
    %66 = arith.mulf %43, %62 : vector<8x128xf32>
    %67 = arith.mulf %58, %64 : vector<8x128xf32>
    %68 = arith.mulf %53, %64 : vector<8x128xf32>
    %cst_20 = arith.constant 0.000000e+00 : f32
    %69 = vector.broadcast %cst_20 : f32 to vector<8x128xf32>
    %cst_21 = arith.constant 0.000000e+00 : f32
    %70 = vector.broadcast %cst_21 : f32 to vector<8x128xf32>
    %71 = arith.addf %12, %70 : vector<8x128xf32>
    %cst_22 = arith.constant 1.000000e+00 : f32
    %72 = vector.broadcast %cst_22 : f32 to vector<8x128xf32>
    %73 = arith.addf %12, %72 : vector<8x128xf32>
    %74 = arith.mulf %71, %71 : vector<8x128xf32>
    %75 = arith.mulf %73, %73 : vector<8x128xf32>
    %76 = arith.addf %74, %75 : vector<8x128xf32>
    %77 = arith.mulf %65, %65 : vector<8x128xf32>
    %78 = arith.mulf %76, %77 : vector<8x128xf32>
    %79 = arith.addf %69, %78 : vector<8x128xf32>
    %cst_23 = arith.constant 2.000000e+00 : f32
    %80 = vector.broadcast %cst_23 : f32 to vector<8x128xf32>
    %81 = arith.addf %12, %80 : vector<8x128xf32>
    %cst_24 = arith.constant 3.000000e+00 : f32
    %82 = vector.broadcast %cst_24 : f32 to vector<8x128xf32>
    %83 = arith.addf %12, %82 : vector<8x128xf32>
    %84 = arith.mulf %81, %81 : vector<8x128xf32>
    %85 = arith.mulf %83, %83 : vector<8x128xf32>
    %86 = arith.addf %84, %85 : vector<8x128xf32>
    %87 = arith.mulf %66, %66 : vector<8x128xf32>
    %88 = arith.mulf %86, %87 : vector<8x128xf32>
    %89 = arith.addf %79, %88 : vector<8x128xf32>
    %cst_25 = arith.constant 4.000000e+00 : f32
    %90 = vector.broadcast %cst_25 : f32 to vector<8x128xf32>
    %91 = arith.addf %12, %90 : vector<8x128xf32>
    %cst_26 = arith.constant 5.000000e+00 : f32
    %92 = vector.broadcast %cst_26 : f32 to vector<8x128xf32>
    %93 = arith.addf %12, %92 : vector<8x128xf32>
    %94 = arith.mulf %91, %91 : vector<8x128xf32>
    %95 = arith.mulf %93, %93 : vector<8x128xf32>
    %96 = arith.addf %94, %95 : vector<8x128xf32>
    %97 = arith.mulf %67, %67 : vector<8x128xf32>
    %98 = arith.mulf %96, %97 : vector<8x128xf32>
    %99 = arith.addf %89, %98 : vector<8x128xf32>
    %cst_27 = arith.constant 6.000000e+00 : f32
    %100 = vector.broadcast %cst_27 : f32 to vector<8x128xf32>
    %101 = arith.addf %12, %100 : vector<8x128xf32>
    %cst_28 = arith.constant 7.000000e+00 : f32
    %102 = vector.broadcast %cst_28 : f32 to vector<8x128xf32>
    %103 = arith.addf %12, %102 : vector<8x128xf32>
    %104 = arith.mulf %101, %101 : vector<8x128xf32>
    %105 = arith.mulf %103, %103 : vector<8x128xf32>
    %106 = arith.addf %104, %105 : vector<8x128xf32>
    %107 = arith.mulf %68, %68 : vector<8x128xf32>
    %108 = arith.mulf %106, %107 : vector<8x128xf32>
    %109 = arith.addf %99, %108 : vector<8x128xf32>
    %cst_29 = arith.constant 8.000000e+00 : f32
    %110 = vector.broadcast %cst_29 : f32 to vector<8x128xf32>
    %111 = arith.addf %12, %110 : vector<8x128xf32>
    %cst_30 = arith.constant 1.000000e+00 : f32
    %112 = vector.broadcast %cst_30 : f32 to vector<8x128xf32>
    %113 = arith.divf %112, %111 : vector<8x128xf32>
    %114 = arith.mulf %113, %113 : vector<8x128xf32>
    %cst_31 = arith.constant 5.000000e-01 : f32
    %115 = vector.broadcast %cst_31 : f32 to vector<8x128xf32>
    %116 = arith.mulf %115, %114 : vector<8x128xf32>
    %117 = arith.addf %113, %116 : vector<8x128xf32>
    %118 = arith.mulf %114, %113 : vector<8x128xf32>
    %cst_32 = arith.constant 3.000000e+01 : f32
    %119 = vector.broadcast %cst_32 : f32 to vector<8x128xf32>
    %120 = arith.divf %114, %119 : vector<8x128xf32>
    %cst_33 = arith.constant 0.0238095243 : f32
    %121 = vector.broadcast %cst_33 : f32 to vector<8x128xf32>
    %122 = arith.subf %121, %120 : vector<8x128xf32>
    %123 = arith.mulf %114, %122 : vector<8x128xf32>
    %cst_34 = arith.constant 0.0333333351 : f32
    %124 = vector.broadcast %cst_34 : f32 to vector<8x128xf32>
    %125 = arith.subf %124, %123 : vector<8x128xf32>
    %126 = arith.mulf %114, %125 : vector<8x128xf32>
    %cst_35 = arith.constant 0.166666672 : f32
    %127 = vector.broadcast %cst_35 : f32 to vector<8x128xf32>
    %128 = arith.subf %127, %126 : vector<8x128xf32>
    %129 = arith.mulf %118, %128 : vector<8x128xf32>
    %130 = arith.addf %117, %129 : vector<8x128xf32>
    %131 = arith.addf %130, %109 : vector<8x128xf32>
    %132 = arith.mulf %38, %131 : vector<8x128xf32>
    %cst_36 = arith.constant dense<0.000000e+00> : vector<128xf32>
    %133 = vector.multi_reduction <add>, %132, %cst_36 [0] : vector<8x128xf32> to vector<128xf32>
    %134 = vector.shape_cast %133 : vector<128xf32> to vector<1x128xf32>
    %cst_37 = arith.constant 1.000000e+00 : f32
    %135 = vector.broadcast %cst_37 : f32 to vector<8x128xf32>
    %136 = arith.subf %135, %18 : vector<8x128xf32>
    %137 = arith.mulf %12, %136 : vector<8x128xf32>
    %cst_38 = arith.constant 1.000000e+00 : f32
    %138 = vector.broadcast %cst_38 : f32 to vector<8x128xf32>
    %139 = arith.mulf %138, %18 : vector<8x128xf32>
    %140 = arith.addf %137, %139 : vector<8x128xf32>
    %cst_39 = arith.constant dense<0.000000e+00> : vector<128xf32>
    %141 = vector.multi_reduction <add>, %140, %cst_39 [0] : vector<8x128xf32> to vector<128xf32>
    %142 = vector.shape_cast %141 : vector<128xf32> to vector<1x128xf32>
    %cst_40 = arith.constant 0.000000e+00 : f32
    %143 = vector.broadcast %cst_40 : f32 to vector<8x128xf32>
    %144 = arith.addf %140, %143 : vector<8x128xf32>
    %cst_41 = arith.constant 1.000000e+00 : f32
    %145 = vector.broadcast %cst_41 : f32 to vector<8x128xf32>
    %146 = arith.addf %140, %145 : vector<8x128xf32>
    %147 = arith.mulf %144, %146 : vector<8x128xf32>
    %cst_42 = arith.constant 2.000000e+00 : f32
    %148 = vector.broadcast %cst_42 : f32 to vector<8x128xf32>
    %149 = arith.addf %140, %148 : vector<8x128xf32>
    %cst_43 = arith.constant 3.000000e+00 : f32
    %150 = vector.broadcast %cst_43 : f32 to vector<8x128xf32>
    %151 = arith.addf %140, %150 : vector<8x128xf32>
    %152 = arith.mulf %149, %151 : vector<8x128xf32>
    %cst_44 = arith.constant 4.000000e+00 : f32
    %153 = vector.broadcast %cst_44 : f32 to vector<8x128xf32>
    %154 = arith.addf %140, %153 : vector<8x128xf32>
    %cst_45 = arith.constant 5.000000e+00 : f32
    %155 = vector.broadcast %cst_45 : f32 to vector<8x128xf32>
    %156 = arith.addf %140, %155 : vector<8x128xf32>
    %157 = arith.mulf %154, %156 : vector<8x128xf32>
    %cst_46 = arith.constant 6.000000e+00 : f32
    %158 = vector.broadcast %cst_46 : f32 to vector<8x128xf32>
    %159 = arith.addf %140, %158 : vector<8x128xf32>
    %cst_47 = arith.constant 7.000000e+00 : f32
    %160 = vector.broadcast %cst_47 : f32 to vector<8x128xf32>
    %161 = arith.addf %140, %160 : vector<8x128xf32>
    %162 = arith.mulf %159, %161 : vector<8x128xf32>
    %163 = arith.mulf %147, %152 : vector<8x128xf32>
    %164 = arith.mulf %157, %162 : vector<8x128xf32>
    %cst_48 = arith.constant 1.000000e+00 : f32
    %165 = vector.broadcast %cst_48 : f32 to vector<8x128xf32>
    %166 = arith.divf %165, %163 : vector<8x128xf32>
    %cst_49 = arith.constant 1.000000e+00 : f32
    %167 = vector.broadcast %cst_49 : f32 to vector<8x128xf32>
    %168 = arith.divf %167, %164 : vector<8x128xf32>
    %169 = arith.mulf %152, %166 : vector<8x128xf32>
    %170 = arith.mulf %147, %166 : vector<8x128xf32>
    %171 = arith.mulf %162, %168 : vector<8x128xf32>
    %172 = arith.mulf %157, %168 : vector<8x128xf32>
    %173 = arith.addf %140, %140 : vector<8x128xf32>
    %cst_50 = arith.constant 1.000000e+00 : f32
    %174 = vector.broadcast %cst_50 : f32 to vector<8x128xf32>
    %175 = arith.addf %173, %174 : vector<8x128xf32>
    %176 = arith.mulf %175, %169 : vector<8x128xf32>
    %cst_51 = arith.constant 5.000000e+00 : f32
    %177 = vector.broadcast %cst_51 : f32 to vector<8x128xf32>
    %178 = arith.addf %173, %177 : vector<8x128xf32>
    %179 = arith.mulf %178, %170 : vector<8x128xf32>
    %180 = arith.addf %176, %179 : vector<8x128xf32>
    %cst_52 = arith.constant 9.000000e+00 : f32
    %181 = vector.broadcast %cst_52 : f32 to vector<8x128xf32>
    %182 = arith.addf %173, %181 : vector<8x128xf32>
    %183 = arith.mulf %182, %171 : vector<8x128xf32>
    %184 = arith.addf %180, %183 : vector<8x128xf32>
    %cst_53 = arith.constant 1.300000e+01 : f32
    %185 = vector.broadcast %cst_53 : f32 to vector<8x128xf32>
    %186 = arith.addf %173, %185 : vector<8x128xf32>
    %187 = arith.mulf %186, %172 : vector<8x128xf32>
    %188 = arith.addf %184, %187 : vector<8x128xf32>
    %189 = arith.mulf %163, %164 : vector<8x128xf32>
    %190 = math.log %189 : vector<8x128xf32>
    %cst_54 = arith.constant 8.000000e+00 : f32
    %191 = vector.broadcast %cst_54 : f32 to vector<8x128xf32>
    %192 = arith.addf %140, %191 : vector<8x128xf32>
    %cst_55 = arith.constant 1.000000e+00 : f32
    %193 = vector.broadcast %cst_55 : f32 to vector<8x128xf32>
    %194 = arith.divf %193, %192 : vector<8x128xf32>
    %195 = arith.mulf %194, %194 : vector<8x128xf32>
    %196 = math.log %192 : vector<8x128xf32>
    %cst_56 = arith.constant 5.000000e-01 : f32
    %197 = vector.broadcast %cst_56 : f32 to vector<8x128xf32>
    %198 = arith.subf %192, %197 : vector<8x128xf32>
    %199 = arith.mulf %198, %196 : vector<8x128xf32>
    %200 = arith.subf %199, %192 : vector<8x128xf32>
    %cst_57 = arith.constant 0.918938517 : f32
    %201 = vector.broadcast %cst_57 : f32 to vector<8x128xf32>
    %202 = arith.addf %200, %201 : vector<8x128xf32>
    %cst_58 = arith.constant 7.93650805E-4 : f32
    %203 = vector.broadcast %cst_58 : f32 to vector<8x128xf32>
    %204 = arith.mulf %195, %203 : vector<8x128xf32>
    %cst_59 = arith.constant 0.00277777785 : f32
    %205 = vector.broadcast %cst_59 : f32 to vector<8x128xf32>
    %206 = arith.subf %205, %204 : vector<8x128xf32>
    %207 = arith.mulf %195, %206 : vector<8x128xf32>
    %cst_60 = arith.constant 0.0833333358 : f32
    %208 = vector.broadcast %cst_60 : f32 to vector<8x128xf32>
    %209 = arith.subf %208, %207 : vector<8x128xf32>
    %210 = arith.mulf %194, %209 : vector<8x128xf32>
    %211 = arith.addf %202, %210 : vector<8x128xf32>
    %212 = arith.subf %211, %190 : vector<8x128xf32>
    %cst_61 = arith.constant 5.000000e-01 : f32
    %213 = vector.broadcast %cst_61 : f32 to vector<8x128xf32>
    %214 = arith.mulf %213, %194 : vector<8x128xf32>
    %215 = arith.subf %196, %214 : vector<8x128xf32>
    %cst_62 = arith.constant 0.0039682542 : f32
    %216 = vector.broadcast %cst_62 : f32 to vector<8x128xf32>
    %217 = arith.mulf %195, %216 : vector<8x128xf32>
    %cst_63 = arith.constant 0.00833333377 : f32
    %218 = vector.broadcast %cst_63 : f32 to vector<8x128xf32>
    %219 = arith.subf %218, %217 : vector<8x128xf32>
    %220 = arith.mulf %195, %219 : vector<8x128xf32>
    %cst_64 = arith.constant 0.0833333358 : f32
    %221 = vector.broadcast %cst_64 : f32 to vector<8x128xf32>
    %222 = arith.subf %221, %220 : vector<8x128xf32>
    %223 = arith.mulf %195, %222 : vector<8x128xf32>
    %224 = arith.subf %215, %223 : vector<8x128xf32>
    %225 = arith.subf %224, %188 : vector<8x128xf32>
    %cst_65 = arith.constant 0.000000e+00 : f32
    %226 = vector.broadcast %cst_65 : f32 to vector<1x128xf32>
    %227 = arith.addf %142, %226 : vector<1x128xf32>
    %cst_66 = arith.constant 1.000000e+00 : f32
    %228 = vector.broadcast %cst_66 : f32 to vector<1x128xf32>
    %229 = arith.addf %142, %228 : vector<1x128xf32>
    %230 = arith.mulf %227, %229 : vector<1x128xf32>
    %cst_67 = arith.constant 2.000000e+00 : f32
    %231 = vector.broadcast %cst_67 : f32 to vector<1x128xf32>
    %232 = arith.addf %142, %231 : vector<1x128xf32>
    %cst_68 = arith.constant 3.000000e+00 : f32
    %233 = vector.broadcast %cst_68 : f32 to vector<1x128xf32>
    %234 = arith.addf %142, %233 : vector<1x128xf32>
    %235 = arith.mulf %232, %234 : vector<1x128xf32>
    %cst_69 = arith.constant 4.000000e+00 : f32
    %236 = vector.broadcast %cst_69 : f32 to vector<1x128xf32>
    %237 = arith.addf %142, %236 : vector<1x128xf32>
    %cst_70 = arith.constant 5.000000e+00 : f32
    %238 = vector.broadcast %cst_70 : f32 to vector<1x128xf32>
    %239 = arith.addf %142, %238 : vector<1x128xf32>
    %240 = arith.mulf %237, %239 : vector<1x128xf32>
    %cst_71 = arith.constant 6.000000e+00 : f32
    %241 = vector.broadcast %cst_71 : f32 to vector<1x128xf32>
    %242 = arith.addf %142, %241 : vector<1x128xf32>
    %cst_72 = arith.constant 7.000000e+00 : f32
    %243 = vector.broadcast %cst_72 : f32 to vector<1x128xf32>
    %244 = arith.addf %142, %243 : vector<1x128xf32>
    %245 = arith.mulf %242, %244 : vector<1x128xf32>
    %246 = arith.mulf %230, %235 : vector<1x128xf32>
    %247 = arith.mulf %240, %245 : vector<1x128xf32>
    %cst_73 = arith.constant 1.000000e+00 : f32
    %248 = vector.broadcast %cst_73 : f32 to vector<1x128xf32>
    %249 = arith.divf %248, %246 : vector<1x128xf32>
    %cst_74 = arith.constant 1.000000e+00 : f32
    %250 = vector.broadcast %cst_74 : f32 to vector<1x128xf32>
    %251 = arith.divf %250, %247 : vector<1x128xf32>
    %252 = arith.mulf %235, %249 : vector<1x128xf32>
    %253 = arith.mulf %230, %249 : vector<1x128xf32>
    %254 = arith.mulf %245, %251 : vector<1x128xf32>
    %255 = arith.mulf %240, %251 : vector<1x128xf32>
    %256 = arith.addf %142, %142 : vector<1x128xf32>
    %cst_75 = arith.constant 1.000000e+00 : f32
    %257 = vector.broadcast %cst_75 : f32 to vector<1x128xf32>
    %258 = arith.addf %256, %257 : vector<1x128xf32>
    %259 = arith.mulf %258, %252 : vector<1x128xf32>
    %cst_76 = arith.constant 5.000000e+00 : f32
    %260 = vector.broadcast %cst_76 : f32 to vector<1x128xf32>
    %261 = arith.addf %256, %260 : vector<1x128xf32>
    %262 = arith.mulf %261, %253 : vector<1x128xf32>
    %263 = arith.addf %259, %262 : vector<1x128xf32>
    %cst_77 = arith.constant 9.000000e+00 : f32
    %264 = vector.broadcast %cst_77 : f32 to vector<1x128xf32>
    %265 = arith.addf %256, %264 : vector<1x128xf32>
    %266 = arith.mulf %265, %254 : vector<1x128xf32>
    %267 = arith.addf %263, %266 : vector<1x128xf32>
    %cst_78 = arith.constant 1.300000e+01 : f32
    %268 = vector.broadcast %cst_78 : f32 to vector<1x128xf32>
    %269 = arith.addf %256, %268 : vector<1x128xf32>
    %270 = arith.mulf %269, %255 : vector<1x128xf32>
    %271 = arith.addf %267, %270 : vector<1x128xf32>
    %272 = arith.mulf %246, %247 : vector<1x128xf32>
    %273 = math.log %272 : vector<1x128xf32>
    %cst_79 = arith.constant 8.000000e+00 : f32
    %274 = vector.broadcast %cst_79 : f32 to vector<1x128xf32>
    %275 = arith.addf %142, %274 : vector<1x128xf32>
    %cst_80 = arith.constant 1.000000e+00 : f32
    %276 = vector.broadcast %cst_80 : f32 to vector<1x128xf32>
    %277 = arith.divf %276, %275 : vector<1x128xf32>
    %278 = arith.mulf %277, %277 : vector<1x128xf32>
    %279 = math.log %275 : vector<1x128xf32>
    %cst_81 = arith.constant 5.000000e-01 : f32
    %280 = vector.broadcast %cst_81 : f32 to vector<1x128xf32>
    %281 = arith.subf %275, %280 : vector<1x128xf32>
    %282 = arith.mulf %281, %279 : vector<1x128xf32>
    %283 = arith.subf %282, %275 : vector<1x128xf32>
    %cst_82 = arith.constant 0.918938517 : f32
    %284 = vector.broadcast %cst_82 : f32 to vector<1x128xf32>
    %285 = arith.addf %283, %284 : vector<1x128xf32>
    %cst_83 = arith.constant 7.93650805E-4 : f32
    %286 = vector.broadcast %cst_83 : f32 to vector<1x128xf32>
    %287 = arith.mulf %278, %286 : vector<1x128xf32>
    %cst_84 = arith.constant 0.00277777785 : f32
    %288 = vector.broadcast %cst_84 : f32 to vector<1x128xf32>
    %289 = arith.subf %288, %287 : vector<1x128xf32>
    %290 = arith.mulf %278, %289 : vector<1x128xf32>
    %cst_85 = arith.constant 0.0833333358 : f32
    %291 = vector.broadcast %cst_85 : f32 to vector<1x128xf32>
    %292 = arith.subf %291, %290 : vector<1x128xf32>
    %293 = arith.mulf %277, %292 : vector<1x128xf32>
    %294 = arith.addf %285, %293 : vector<1x128xf32>
    %295 = arith.subf %294, %273 : vector<1x128xf32>
    %cst_86 = arith.constant 5.000000e-01 : f32
    %296 = vector.broadcast %cst_86 : f32 to vector<1x128xf32>
    %297 = arith.mulf %296, %277 : vector<1x128xf32>
    %298 = arith.subf %279, %297 : vector<1x128xf32>
    %cst_87 = arith.constant 0.0039682542 : f32
    %299 = vector.broadcast %cst_87 : f32 to vector<1x128xf32>
    %300 = arith.mulf %278, %299 : vector<1x128xf32>
    %cst_88 = arith.constant 0.00833333377 : f32
    %301 = vector.broadcast %cst_88 : f32 to vector<1x128xf32>
    %302 = arith.subf %301, %300 : vector<1x128xf32>
    %303 = arith.mulf %278, %302 : vector<1x128xf32>
    %cst_89 = arith.constant 0.0833333358 : f32
    %304 = vector.broadcast %cst_89 : f32 to vector<1x128xf32>
    %305 = arith.subf %304, %303 : vector<1x128xf32>
    %306 = arith.mulf %278, %305 : vector<1x128xf32>
    %307 = arith.subf %298, %306 : vector<1x128xf32>
    %308 = arith.subf %307, %271 : vector<1x128xf32>
    %cst_90 = arith.constant 8.52516174 : f32
    %309 = vector.broadcast %cst_90 : f32 to vector<1x128xf32>
    %310 = arith.subf %295, %309 : vector<1x128xf32>
    %cst_91 = arith.constant 0.000000e+00 : f32
    %311 = vector.broadcast %cst_91 : f32 to vector<1x128xf32>
    %312 = arith.addf %310, %311 : vector<1x128xf32>
    %cst_92 = arith.constant dense<0.000000e+00> : vector<128xf32>
    %313 = vector.multi_reduction <add>, %212, %cst_92 [0] : vector<8x128xf32> to vector<128xf32>
    %314 = vector.shape_cast %313 : vector<128xf32> to vector<1x128xf32>
    %315 = arith.subf %312, %314 : vector<1x128xf32>
    %cst_93 = arith.constant 1.000000e+00 : f32
    %316 = vector.broadcast %cst_93 : f32 to vector<8x128xf32>
    %317 = arith.subf %140, %316 : vector<8x128xf32>
    %318 = vector.broadcast %308 : vector<1x128xf32> to vector<8x128xf32>
    %319 = arith.subf %225, %318 : vector<8x128xf32>
    %320 = arith.mulf %317, %319 : vector<8x128xf32>
    %cst_94 = arith.constant dense<0.000000e+00> : vector<128xf32>
    %321 = vector.multi_reduction <add>, %320, %cst_94 [0] : vector<8x128xf32> to vector<128xf32>
    %322 = vector.shape_cast %321 : vector<128xf32> to vector<1x128xf32>
    %323 = arith.addf %315, %322 : vector<1x128xf32>
    %cst_95 = arith.constant 5.000000e-01 : f32
    %324 = vector.broadcast %cst_95 : f32 to vector<1x128xf32>
    %325 = arith.mulf %324, %323 : vector<1x128xf32>
    %326 = arith.addf %134, %325 : vector<1x128xf32>
    %cst_96 = arith.constant 0.000000e+00 : f32
    %327 = vector.broadcast %cst_96 : f32 to vector<1x128xf32>
    %328 = arith.addf %20, %327 : vector<1x128xf32>
    %cst_97 = arith.constant 1.000000e+00 : f32
    %329 = vector.broadcast %cst_97 : f32 to vector<1x128xf32>
    %330 = arith.addf %20, %329 : vector<1x128xf32>
    %331 = arith.mulf %328, %330 : vector<1x128xf32>
    %cst_98 = arith.constant 2.000000e+00 : f32
    %332 = vector.broadcast %cst_98 : f32 to vector<1x128xf32>
    %333 = arith.addf %20, %332 : vector<1x128xf32>
    %cst_99 = arith.constant 3.000000e+00 : f32
    %334 = vector.broadcast %cst_99 : f32 to vector<1x128xf32>
    %335 = arith.addf %20, %334 : vector<1x128xf32>
    %336 = arith.mulf %333, %335 : vector<1x128xf32>
    %cst_100 = arith.constant 4.000000e+00 : f32
    %337 = vector.broadcast %cst_100 : f32 to vector<1x128xf32>
    %338 = arith.addf %20, %337 : vector<1x128xf32>
    %cst_101 = arith.constant 5.000000e+00 : f32
    %339 = vector.broadcast %cst_101 : f32 to vector<1x128xf32>
    %340 = arith.addf %20, %339 : vector<1x128xf32>
    %341 = arith.mulf %338, %340 : vector<1x128xf32>
    %cst_102 = arith.constant 6.000000e+00 : f32
    %342 = vector.broadcast %cst_102 : f32 to vector<1x128xf32>
    %343 = arith.addf %20, %342 : vector<1x128xf32>
    %cst_103 = arith.constant 7.000000e+00 : f32
    %344 = vector.broadcast %cst_103 : f32 to vector<1x128xf32>
    %345 = arith.addf %20, %344 : vector<1x128xf32>
    %346 = arith.mulf %343, %345 : vector<1x128xf32>
    %347 = arith.mulf %331, %336 : vector<1x128xf32>
    %348 = arith.mulf %341, %346 : vector<1x128xf32>
    %cst_104 = arith.constant 1.000000e+00 : f32
    %349 = vector.broadcast %cst_104 : f32 to vector<1x128xf32>
    %350 = arith.divf %349, %347 : vector<1x128xf32>
    %cst_105 = arith.constant 1.000000e+00 : f32
    %351 = vector.broadcast %cst_105 : f32 to vector<1x128xf32>
    %352 = arith.divf %351, %348 : vector<1x128xf32>
    %353 = arith.mulf %336, %350 : vector<1x128xf32>
    %354 = arith.mulf %331, %350 : vector<1x128xf32>
    %355 = arith.mulf %346, %352 : vector<1x128xf32>
    %356 = arith.mulf %341, %352 : vector<1x128xf32>
    %cst_106 = arith.constant 0.000000e+00 : f32
    %357 = vector.broadcast %cst_106 : f32 to vector<1x128xf32>
    %cst_107 = arith.constant 0.000000e+00 : f32
    %358 = vector.broadcast %cst_107 : f32 to vector<1x128xf32>
    %359 = arith.addf %20, %358 : vector<1x128xf32>
    %cst_108 = arith.constant 1.000000e+00 : f32
    %360 = vector.broadcast %cst_108 : f32 to vector<1x128xf32>
    %361 = arith.addf %20, %360 : vector<1x128xf32>
    %362 = arith.mulf %359, %359 : vector<1x128xf32>
    %363 = arith.mulf %361, %361 : vector<1x128xf32>
    %364 = arith.addf %362, %363 : vector<1x128xf32>
    %365 = arith.mulf %353, %353 : vector<1x128xf32>
    %366 = arith.mulf %364, %365 : vector<1x128xf32>
    %367 = arith.addf %357, %366 : vector<1x128xf32>
    %cst_109 = arith.constant 2.000000e+00 : f32
    %368 = vector.broadcast %cst_109 : f32 to vector<1x128xf32>
    %369 = arith.addf %20, %368 : vector<1x128xf32>
    %cst_110 = arith.constant 3.000000e+00 : f32
    %370 = vector.broadcast %cst_110 : f32 to vector<1x128xf32>
    %371 = arith.addf %20, %370 : vector<1x128xf32>
    %372 = arith.mulf %369, %369 : vector<1x128xf32>
    %373 = arith.mulf %371, %371 : vector<1x128xf32>
    %374 = arith.addf %372, %373 : vector<1x128xf32>
    %375 = arith.mulf %354, %354 : vector<1x128xf32>
    %376 = arith.mulf %374, %375 : vector<1x128xf32>
    %377 = arith.addf %367, %376 : vector<1x128xf32>
    %cst_111 = arith.constant 4.000000e+00 : f32
    %378 = vector.broadcast %cst_111 : f32 to vector<1x128xf32>
    %379 = arith.addf %20, %378 : vector<1x128xf32>
    %cst_112 = arith.constant 5.000000e+00 : f32
    %380 = vector.broadcast %cst_112 : f32 to vector<1x128xf32>
    %381 = arith.addf %20, %380 : vector<1x128xf32>
    %382 = arith.mulf %379, %379 : vector<1x128xf32>
    %383 = arith.mulf %381, %381 : vector<1x128xf32>
    %384 = arith.addf %382, %383 : vector<1x128xf32>
    %385 = arith.mulf %355, %355 : vector<1x128xf32>
    %386 = arith.mulf %384, %385 : vector<1x128xf32>
    %387 = arith.addf %377, %386 : vector<1x128xf32>
    %cst_113 = arith.constant 6.000000e+00 : f32
    %388 = vector.broadcast %cst_113 : f32 to vector<1x128xf32>
    %389 = arith.addf %20, %388 : vector<1x128xf32>
    %cst_114 = arith.constant 7.000000e+00 : f32
    %390 = vector.broadcast %cst_114 : f32 to vector<1x128xf32>
    %391 = arith.addf %20, %390 : vector<1x128xf32>
    %392 = arith.mulf %389, %389 : vector<1x128xf32>
    %393 = arith.mulf %391, %391 : vector<1x128xf32>
    %394 = arith.addf %392, %393 : vector<1x128xf32>
    %395 = arith.mulf %356, %356 : vector<1x128xf32>
    %396 = arith.mulf %394, %395 : vector<1x128xf32>
    %397 = arith.addf %387, %396 : vector<1x128xf32>
    %cst_115 = arith.constant 8.000000e+00 : f32
    %398 = vector.broadcast %cst_115 : f32 to vector<1x128xf32>
    %399 = arith.addf %20, %398 : vector<1x128xf32>
    %cst_116 = arith.constant 1.000000e+00 : f32
    %400 = vector.broadcast %cst_116 : f32 to vector<1x128xf32>
    %401 = arith.divf %400, %399 : vector<1x128xf32>
    %402 = arith.mulf %401, %401 : vector<1x128xf32>
    %cst_117 = arith.constant 5.000000e-01 : f32
    %403 = vector.broadcast %cst_117 : f32 to vector<1x128xf32>
    %404 = arith.mulf %403, %402 : vector<1x128xf32>
    %405 = arith.addf %401, %404 : vector<1x128xf32>
    %406 = arith.mulf %402, %401 : vector<1x128xf32>
    %cst_118 = arith.constant 3.000000e+01 : f32
    %407 = vector.broadcast %cst_118 : f32 to vector<1x128xf32>
    %408 = arith.divf %402, %407 : vector<1x128xf32>
    %cst_119 = arith.constant 0.0238095243 : f32
    %409 = vector.broadcast %cst_119 : f32 to vector<1x128xf32>
    %410 = arith.subf %409, %408 : vector<1x128xf32>
    %411 = arith.mulf %402, %410 : vector<1x128xf32>
    %cst_120 = arith.constant 0.0333333351 : f32
    %412 = vector.broadcast %cst_120 : f32 to vector<1x128xf32>
    %413 = arith.subf %412, %411 : vector<1x128xf32>
    %414 = arith.mulf %402, %413 : vector<1x128xf32>
    %cst_121 = arith.constant 0.166666672 : f32
    %415 = vector.broadcast %cst_121 : f32 to vector<1x128xf32>
    %416 = arith.subf %415, %414 : vector<1x128xf32>
    %417 = arith.mulf %406, %416 : vector<1x128xf32>
    %418 = arith.addf %405, %417 : vector<1x128xf32>
    %419 = arith.addf %418, %397 : vector<1x128xf32>
    %cst_122 = arith.constant 1.000000e+00 : f32
    %420 = vector.broadcast %cst_122 : f32 to vector<8x128xf32>
    %421 = arith.divf %420, %131 : vector<8x128xf32>
    %422 = math.log %131 : vector<8x128xf32>
    %cst_123 = arith.constant dense<0.000000e+00> : vector<128xf32>
    %423 = vector.multi_reduction <add>, %422, %cst_123 [0] : vector<8x128xf32> to vector<128xf32>
    %424 = vector.shape_cast %423 : vector<128xf32> to vector<1x128xf32>
    %425 = vector.broadcast %419 : vector<1x128xf32> to vector<8x128xf32>
    %426 = arith.mulf %425, %421 : vector<8x128xf32>
    %cst_124 = arith.constant dense<0.000000e+00> : vector<128xf32>
    %427 = vector.multi_reduction <add>, %426, %cst_124 [0] : vector<8x128xf32> to vector<128xf32>
    %428 = vector.shape_cast %427 : vector<128xf32> to vector<1x128xf32>
    %cst_125 = arith.constant 1.000000e+00 : f32
    %429 = vector.broadcast %cst_125 : f32 to vector<1x128xf32>
    %430 = arith.subf %429, %428 : vector<1x128xf32>
    %431 = math.log %430 : vector<1x128xf32>
    %432 = arith.addf %424, %431 : vector<1x128xf32>
    %cst_126 = arith.constant 0.00999999977 : f32
    %433 = vector.broadcast %cst_126 : f32 to vector<1x128xf32>
    %434 = arith.mulf %433, %432 : vector<1x128xf32>
    %435 = arith.subf %326, %434 : vector<1x128xf32>
    %c0_127 = arith.constant 0 : index
    %c0_128 = arith.constant 0 : index
    %436 = vector.load %arg3[%c0_127, %c0_128] : memref<1x128xf32, #tpu.memory_space<vmem>>, vector<1x128xf32>
    tpu.vector_store %arg3[%c0_127, %c0_128], %435 {strides = array<i32>} : memref<1x128xf32, #tpu.memory_space<vmem>>, vector<1x128xf32>,
    return
  }
  func.func @transform_0(%arg0: i32) -> (i32, i32) {
    %c0_i32 = arith.constant 0 : i32
    %c0_i32_0 = arith.constant 0 : i32
    return %c0_i32, %arg0 : i32, i32
  }
  func.func @transform_1(%arg0: i32) -> (i32, i32) {
    %c0_i32 = arith.constant 0 : i32
    %c0_i32_0 = arith.constant 0 : i32
    return %c0_i32, %arg0 : i32, i32
  }
  func.func @transform_2(%arg0: i32) -> (i32, i32) {
    %c0_i32 = arith.constant 0 : i32
    %c0_i32_0 = arith.constant 0 : i32
    return %c0_i32, %arg0 : i32, i32
  }
}

</mosaic_0001>

<llo_original>
// kernel: tpu_custom_call.1
$region0: #{tpu_custom_call.1}
  #allocation0 [shape = 'u32[]', space=smem, size = 0x4, offset = 0x4, fixed_abs, tag = 'smem constant byte address 0x4 - core index']
  #allocation1 [shape = 'u32[144,128]{1,0:T(1,128)}', space=vmem, size = 0x12000, scoped, tag = 'internal scratch']
  %s0 = inlined_call_operand.hbm [shape: f32[8,128], index: 0, kind: input, shape index: {}]
  %s1 = inlined_call_operand.vmem [shape: s32[1,128], index: 1, kind: input, shape index: {}]
  %s2 = inlined_call_operand.hbm [shape: f32[1,128], index: 2, kind: output, shape index: {}]
  %s3 = sld [smem:[#allocation0]]
  $region22: #{tpu_custom_call.1} parent=0
    _
  %s5 = ssub.s32 1, %s3
  %s6 = scalar_select 0, %s5, %s3
  $region1: #{tpu_custom_call.1} parent=0
    #allocation2 [shape = 'u8[4096]{0}', space=vmem, size = 0x1000, scoped, tag = 'input window, operand 0, single buffered']
    #allocation3 [shape = 's32[1]{0}', space=sflag, size = 0x4, scoped, tag = 'scoped memory for tpu_custom_call.1']
    #allocation4 [shape = 's32[1]{0}', space=sflag, size = 0x4, scoped, tag = 'scoped memory for tpu_custom_call.1']
    #allocation5 [shape = 'u8[512]{0}', space=vmem, size = 0x400, scoped, tag = 'output window, operand 0, single buffered']
    %7 = vsyncpa [#allocation3], 0
    %8 = vsyncpa [#allocation4], 0
    // Predicated region
    $region2: #{tpu_custom_call.1} parent=1 // pred_check
      _
    $region3: #{tpu_custom_call.1} parent=1 // pred_check_branch
      %10 = sbr.rel (0) target = $region5
    $region4: #{tpu_custom_call.1} parent=1 // pred_region
      %s12 = ssub.s32 128, 128
      %13 = vsyncadd [#allocation3], %s12
      %s15 = sshll.u32 [#allocation2], 4
      %s16 = int_to_ptr.vmem [resolvable:$true] %s15
      %18 = dma.hbm_to_vmem [thread:$0]  %s0, 128, %s16, [#allocation3]
    $region5: #{tpu_custom_call.1} parent=1 // pred_fallthru
      _
    // Predicated region
    $region6: #{tpu_custom_call.1} parent=1 // pred_check
      _
    $region7: #{tpu_custom_call.1} parent=1 // pred_check_branch
      %20 = sbr.rel (0) target = $region9
    $region8: #{tpu_custom_call.1} parent=1 // pred_region
      _
    $region9: #{tpu_custom_call.1} parent=1 // pred_fallthru
      _
    // Predicated region
    $region10: #{tpu_custom_call.1} parent=1 // pred_check
      _
    $region11: #{tpu_custom_call.1} parent=1 // pred_check_branch
      %22 = sbr.rel (0) target = $region13
    $region12: #{tpu_custom_call.1} parent=1 // pred_region
      %23 = dma.done [#allocation3], 128
    $region13: #{tpu_custom_call.1} parent=1 // pred_fallthru
      _
    %v24 = vld [vmem:[#allocation2] sm:$0xff]
    %v25 = vmax.f32 %v24, 0.0
    %v26 = vand.u32 2147483647, %v24
    %v27 = vsub.f32 0.0, %v26
    %v28 = vmul.f32 %v27, 1.442695
    %v29 = vpow.pop %v28
    %v30 = vadd.f32 %v29, 1.0
    %v31 = vlog2.pop %v30
    %v32 = vmul.f32 %v31, 0.6931472
    %v33 = vadd.f32 %v25, %v32
    %v34 = vadd.f32 %v33, 1.0
    %v35 = vlaneseq
    %v36 = vshrl.u32 %v35, 7
    %v37 = vld [vmem:[%s1] sm:$0x1]
    %v38 = vlaneseq
    %v39 = vshrl.u32 %v38, 7
    %v40 = vsub.s32 0, %v39
    %v41 = vrot.slane %v37, %v40
    %vm42 = vcmp.eq.s32.totalorder %v36, %v41
    %v43 = vsel %vm42, 1, 0
    %v44 = vcvt.s32.f32 %v43
    %v45 = vrot.slane %v34, 4
    %v46 = vadd.f32 %v34, %v45
    %v47 = vrot.slane %v46, 2
    %v48 = vadd.f32 %v46, %v47
    %v49 = vrot.slane %v48, 1
    %v50 = vadd.f32 %v48, %v49
    %v51 = vrcp.pop %v50
    %v52 = vmul.f32 1.0, %v51
    %v53 = vadd.f32 %v50, 1.0
    %v54 = vrcp.pop %v53
    %v55 = vmul.f32 1.0, %v54
    %v56 = vmul.f32 %v34, %v52
    %v57 = vsub.f32 %v50, %v34
    %v58 = vmul.f32 %v34, %v57
    %v59 = vmul.f32 %v52, %v52
    %v60 = vmul.f32 %v59, %v55
    %v61 = vmul.f32 %v58, %v60
    %v62 = vsub.f32 %v44, %v56
    %v63 = vmul.f32 %v62, %v62
    %v64 = vadd.f32 %v61, %v63
    %v65 = vadd.f32 %v34, 0.0
    %v66 = vadd.f32 %v34, 1.0
    %v67 = vmul.f32 %v65, %v66
    %v68 = vadd.f32 %v34, 2.0
    %v69 = vadd.f32 %v34, 3.0
    %v70 = vmul.f32 %v68, %v69
    %v71 = vadd.f32 %v34, 4.0
    %v72 = vadd.f32 %v34, 5.0
    %v73 = vmul.f32 %v71, %v72
    %v74 = vadd.f32 %v34, 6.0
    %v75 = vadd.f32 %v34, 7.0
    %v76 = vmul.f32 %v74, %v75
    %v77 = vmul.f32 %v67, %v70
    %v78 = vmul.f32 %v73, %v76
    %v79 = vrcp.pop %v77
    %v80 = vmul.f32 1.0, %v79
    %v81 = vrcp.pop %v78
    %v82 = vmul.f32 1.0, %v81
    %v83 = vmul.f32 %v70, %v80
    %v84 = vmul.f32 %v67, %v80
    %v85 = vmul.f32 %v76, %v82
    %v86 = vmul.f32 %v73, %v82
    %v87 = vmul.f32 %v65, %v65
    %v88 = vmul.f32 %v66, %v66
    %v89 = vadd.f32 %v87, %v88
    %v90 = vmul.f32 %v83, %v83
    %v91 = vmul.f32 %v89, %v90
    %v92 = vadd.f32 %v91, 0.0
    %v93 = vmul.f32 %v68, %v68
    %v94 = vmul.f32 %v69, %v69
    %v95 = vadd.f32 %v93, %v94
    %v96 = vmul.f32 %v84, %v84
    %v97 = vmul.f32 %v95, %v96
    %v98 = vadd.f32 %v92, %v97
    %v99 = vmul.f32 %v71, %v71
    %v100 = vmul.f32 %v72, %v72
    %v101 = vadd.f32 %v99, %v100
    %v102 = vmul.f32 %v85, %v85
    %v103 = vmul.f32 %v101, %v102
    %v104 = vadd.f32 %v98, %v103
    %v105 = vmul.f32 %v74, %v74
    %v106 = vmul.f32 %v75, %v75
    %v107 = vadd.f32 %v105, %v106
    %v108 = vmul.f32 %v86, %v86
    %v109 = vmul.f32 %v107, %v108
    %v110 = vadd.f32 %v104, %v109
    %v111 = vadd.f32 %v34, 8.0
    %v112 = vrcp.pop %v111
    %v113 = vmul.f32 1.0, %v112
    %v114 = vmul.f32 %v113, %v113
    %v115 = vmul.f32 %v114, 0.5
    %v116 = vadd.f32 %v113, %v115
    %v117 = vmul.f32 %v114, %v113
    %v118 = vrcp.pop 30.0
    %v119 = vmul.f32 %v114, %v118
    %v120 = vsub.f32 0.023809524, %v119
    %v121 = vmul.f32 %v114, %v120
    %v122 = vsub.f32 0.033333335, %v121
    %v123 = vmul.f32 %v114, %v122
    %v124 = vsub.f32 0.16666667, %v123
    %v125 = vmul.f32 %v117, %v124
    %v126 = vadd.f32 %v116, %v125
    %v127 = vadd.f32 %v126, %v110
    %v128 = vmul.f32 %v64, %v127
    %v129 = vrot.slane %v128, 4
    %v130 = vadd.f32 %v128, %v129
    %v131 = vrot.slane %v130, 2
    %v132 = vadd.f32 %v130, %v131
    %v133 = vrot.slane %v132, 1
    %v134 = vadd.f32 %v132, %v133
    %v135 = vsub.f32 1.0, %v44
    %v136 = vmul.f32 %v34, %v135
    %v137 = vadd.f32 %v136, %v44
    %v138 = vrot.slane %v137, 4
    %v139 = vadd.f32 %v137, %v138
    %v140 = vrot.slane %v139, 2
    %v141 = vadd.f32 %v139, %v140
    %v142 = vrot.slane %v141, 1
    %v143 = vadd.f32 %v141, %v142
    %v144 = vadd.f32 %v137, 0.0
    %v145 = vadd.f32 %v137, 1.0
    %v146 = vmul.f32 %v144, %v145
    %v147 = vadd.f32 %v137, 2.0
    %v148 = vadd.f32 %v137, 3.0
    %v149 = vmul.f32 %v147, %v148
    %v150 = vadd.f32 %v137, 4.0
    %v151 = vadd.f32 %v137, 5.0
    %v152 = vmul.f32 %v150, %v151
    %v153 = vadd.f32 %v137, 6.0
    %v154 = vadd.f32 %v137, 7.0
    %v155 = vmul.f32 %v153, %v154
    %v156 = vmul.f32 %v146, %v149
    %v157 = vmul.f32 %v152, %v155
    %v158 = vrcp.pop %v156
    %v159 = vmul.f32 1.0, %v158
    %v160 = vrcp.pop %v157
    %v161 = vmul.f32 1.0, %v160
    %v162 = vmul.f32 %v149, %v159
    %v163 = vmul.f32 %v146, %v159
    %v164 = vmul.f32 %v155, %v161
    %v165 = vmul.f32 %v152, %v161
    %v166 = vadd.f32 %v137, %v137
    %v167 = vadd.f32 %v166, 1.0
    %v168 = vmul.f32 %v167, %v162
    %v169 = vadd.f32 %v166, 5.0
    %v170 = vmul.f32 %v169, %v163
    %v171 = vadd.f32 %v168, %v170
    %v172 = vadd.f32 %v166, 9.0
    %v173 = vmul.f32 %v172, %v164
    %v174 = vadd.f32 %v171, %v173
    %v175 = vadd.f32 %v166, 13.0
    %v176 = vmul.f32 %v175, %v165
    %v177 = vadd.f32 %v174, %v176
    %v178 = vmul.f32 %v156, %v157
    %v179 = vlog2.pop %v178
    %v180 = vmul.f32 %v179, 0.6931472
    %v181 = vadd.f32 %v137, 8.0
    %v182 = vrcp.pop %v181
    %v183 = vmul.f32 1.0, %v182
    %v184 = vmul.f32 %v183, %v183
    %v185 = vlog2.pop %v181
    %v186 = vmul.f32 %v185, 0.6931472
    %v187 = vsub.f32 %v181, 0.5
    %v188 = vmul.f32 %v187, %v186
    %v189 = vsub.f32 %v188, %v181
    %v190 = vadd.f32 %v189, 0.9189385
    %v191 = vmul.f32 %v184, 0.0007936508
    %v192 = vsub.f32 0.0027777778, %v191
    %v193 = vmul.f32 %v184, %v192
    %v194 = vsub.f32 0.083333336, %v193
    %v195 = vmul.f32 %v183, %v194
    %v196 = vadd.f32 %v190, %v195
    %v197 = vsub.f32 %v196, %v180
    %v198 = vmul.f32 %v183, 0.5
    %v199 = vsub.f32 %v186, %v198
    %v200 = vmul.f32 %v184, 0.003968254
    %v201 = vsub.f32 0.008333334, %v200
    %v202 = vmul.f32 %v184, %v201
    %v203 = vsub.f32 0.083333336, %v202
    %v204 = vmul.f32 %v184, %v203
    %v205 = vsub.f32 %v199, %v204
    %v206 = vsub.f32 %v205, %v177
    %v207 = vadd.f32 %v143, 0.0
    %v208 = vadd.f32 %v143, 1.0
    %v209 = vmul.f32 %v207, %v208
    %v210 = vadd.f32 %v143, 2.0
    %v211 = vadd.f32 %v143, 3.0
    %v212 = vmul.f32 %v210, %v211
    %v213 = vadd.f32 %v143, 4.0
    %v214 = vadd.f32 %v143, 5.0
    %v215 = vmul.f32 %v213, %v214
    %v216 = vadd.f32 %v143, 6.0
    %v217 = vadd.f32 %v143, 7.0
    %v218 = vmul.f32 %v216, %v217
    %v219 = vmul.f32 %v209, %v212
    %v220 = vmul.f32 %v215, %v218
    %v221 = vrcp.pop %v219
    %v222 = vmul.f32 1.0, %v221
    %v223 = vrcp.pop %v220
    %v224 = vmul.f32 1.0, %v223
    %v225 = vmul.f32 %v212, %v222
    %v226 = vmul.f32 %v209, %v222
    %v227 = vmul.f32 %v218, %v224
    %v228 = vmul.f32 %v215, %v224
    %v229 = vadd.f32 %v143, %v143
    %v230 = vadd.f32 %v229, 1.0
    %v231 = vmul.f32 %v230, %v225
    %v232 = vadd.f32 %v229, 5.0
    %v233 = vmul.f32 %v232, %v226
    %v234 = vadd.f32 %v231, %v233
    %v235 = vadd.f32 %v229, 9.0
    %v236 = vmul.f32 %v235, %v227
    %v237 = vadd.f32 %v234, %v236
    %v238 = vadd.f32 %v229, 13.0
    %v239 = vmul.f32 %v238, %v228
    %v240 = vadd.f32 %v237, %v239
    %v241 = vmul.f32 %v219, %v220
    %v242 = vlog2.pop %v241
    %v243 = vmul.f32 %v242, 0.6931472
    %v244 = vadd.f32 %v143, 8.0
    %v245 = vrcp.pop %v244
    %v246 = vmul.f32 1.0, %v245
    %v247 = vmul.f32 %v246, %v246
    %v248 = vlog2.pop %v244
    %v249 = vmul.f32 %v248, 0.6931472
    %v250 = vsub.f32 %v244, 0.5
    %v251 = vmul.f32 %v250, %v249
    %v252 = vsub.f32 %v251, %v244
    %v253 = vadd.f32 %v252, 0.9189385
    %v254 = vmul.f32 %v247, 0.0007936508
    %v255 = vsub.f32 0.0027777778, %v254
    %v256 = vmul.f32 %v247, %v255
    %v257 = vsub.f32 0.083333336, %v256
    %v258 = vmul.f32 %v246, %v257
    %v259 = vadd.f32 %v253, %v258
    %v260 = vsub.f32 %v259, %v243
    %v261 = vmul.f32 %v246, 0.5
    %v262 = vsub.f32 %v249, %v261
    %v263 = vmul.f32 %v247, 0.003968254
    %v264 = vsub.f32 0.008333334, %v263
    %v265 = vmul.f32 %v247, %v264
    %v266 = vsub.f32 0.083333336, %v265
    %v267 = vmul.f32 %v247, %v266
    %v268 = vsub.f32 %v262, %v267
    %v269 = vsub.f32 %v268, %v240
    %v270 = vsub.f32 %v260, 8.525162
    %v271 = vadd.f32 %v270, 0.0
    %v272 = vrot.slane %v197, 4
    %v273 = vadd.f32 %v197, %v272
    %v274 = vrot.slane %v273, 2
    %v275 = vadd.f32 %v273, %v274
    %v276 = vrot.slane %v275, 1
    %v277 = vadd.f32 %v275, %v276
    %v278 = vsub.f32 %v271, %v277
    %v279 = vsub.f32 %v137, 1.0
    %v280 = vsub.f32 %v206, %v269
    %v281 = vmul.f32 %v279, %v280
    %v282 = vrot.slane %v281, 4
    %v283 = vadd.f32 %v281, %v282
    %v284 = vrot.slane %v283, 2
    %v285 = vadd.f32 %v283, %v284
    %v286 = vrot.slane %v285, 1
    %v287 = vadd.f32 %v285, %v286
    %v288 = vadd.f32 %v278, %v287
    %v289 = vmul.f32 %v288, 0.5
    %v290 = vadd.f32 %v134, %v289
    %v291 = vadd.f32 %v50, 0.0
    %v292 = vmul.f32 %v291, %v53
    %v293 = vadd.f32 %v50, 2.0
    %v294 = vadd.f32 %v50, 3.0
    %v295 = vmul.f32 %v293, %v294
    %v296 = vadd.f32 %v50, 4.0
    %v297 = vadd.f32 %v50, 5.0
    %v298 = vmul.f32 %v296, %v297
    %v299 = vadd.f32 %v50, 6.0
    %v300 = vadd.f32 %v50, 7.0
    %v301 = vmul.f32 %v299, %v300
    %v302 = vmul.f32 %v292, %v295
    %v303 = vmul.f32 %v298, %v301
    %v304 = vrcp.pop %v302
    %v305 = vmul.f32 1.0, %v304
    %v306 = vrcp.pop %v303
    %v307 = vmul.f32 1.0, %v306
    %v308 = vmul.f32 %v295, %v305
    %v309 = vmul.f32 %v292, %v305
    %v310 = vmul.f32 %v301, %v307
    %v311 = vmul.f32 %v298, %v307
    %v312 = vmul.f32 %v291, %v291
    %v313 = vmul.f32 %v53, %v53
    %v314 = vadd.f32 %v312, %v313
    %v315 = vmul.f32 %v308, %v308
    %v316 = vmul.f32 %v314, %v315
    %v317 = vadd.f32 %v316, 0.0
    %v318 = vmul.f32 %v293, %v293
    %v319 = vmul.f32 %v294, %v294
    %v320 = vadd.f32 %v318, %v319
    %v321 = vmul.f32 %v309, %v309
    %v322 = vmul.f32 %v320, %v321
    %v323 = vadd.f32 %v317, %v322
    %v324 = vmul.f32 %v296, %v296
    %v325 = vmul.f32 %v297, %v297
    %v326 = vadd.f32 %v324, %v325
    %v327 = vmul.f32 %v310, %v310
    %v328 = vmul.f32 %v326, %v327
    %v329 = vadd.f32 %v323, %v328
    %v330 = vmul.f32 %v299, %v299
    %v331 = vmul.f32 %v300, %v300
    %v332 = vadd.f32 %v330, %v331
    %v333 = vmul.f32 %v311, %v311
    %v334 = vmul.f32 %v332, %v333
    %v335 = vadd.f32 %v329, %v334
    %v336 = vadd.f32 %v50, 8.0
    %v337 = vrcp.pop %v336
    %v338 = vmul.f32 1.0, %v337
    %v339 = vmul.f32 %v338, %v338
    %v340 = vmul.f32 %v339, 0.5
    %v341 = vadd.f32 %v338, %v340
    %v342 = vmul.f32 %v339, %v338
    %v343 = vmul.f32 %v339, %v118
    %v344 = vsub.f32 0.023809524, %v343
    %v345 = vmul.f32 %v339, %v344
    %v346 = vsub.f32 0.033333335, %v345
    %v347 = vmul.f32 %v339, %v346
    %v348 = vsub.f32 0.16666667, %v347
    %v349 = vmul.f32 %v342, %v348
    %v350 = vadd.f32 %v341, %v349
    %v351 = vadd.f32 %v350, %v335
    %v352 = vrcp.pop %v127
    %v353 = vmul.f32 1.0, %v352
    %v354 = vlog2.pop %v127
    %v355 = vmul.f32 %v354, 0.6931472
    %v356 = vrot.slane %v355, 4
    %v357 = vadd.f32 %v355, %v356
    %v358 = vrot.slane %v357, 2
    %v359 = vadd.f32 %v357, %v358
    %v360 = vrot.slane %v359, 1
    %v361 = vadd.f32 %v359, %v360
    %v362 = vmul.f32 %v351, %v353
    %v363 = vrot.slane %v362, 4
    %v364 = vadd.f32 %v362, %v363
    %v365 = vrot.slane %v364, 2
    %v366 = vadd.f32 %v364, %v365
    %v367 = vrot.slane %v366, 1
    %v368 = vadd.f32 %v366, %v367
    %v369 = vsub.f32 1.0, %v368
    %v370 = vlog2.pop %v369
    %v371 = vmul.f32 %v370, 0.6931472
    %v372 = vadd.f32 %v361, %v371
    %v373 = vmul.f32 %v372, 0.01
    %v374 = vsub.f32 %v290, %v373
    %375 = vst [vmem:[#allocation5] sm:$0x1] %v374
    // Predicated region
    $region14: #{tpu_custom_call.1} parent=1 // pred_check
      _
    $region15: #{tpu_custom_call.1} parent=1 // pred_check_branch
      %377 = sbr.rel (0) target = $region17
    $region16: #{tpu_custom_call.1} parent=1 // pred_region
      %s379 = ssub.s32 16, 16
      %380 = vsyncadd [#allocation4], %s379
      %s382 = sshll.u32 [#allocation5], 4
      %s383 = int_to_ptr.vmem [resolvable:$true] %s382
      %385 = dma.vmem_to_hbm [thread:$0]  %s383, 16, %s2, [#allocation4]
    $region17: #{tpu_custom_call.1} parent=1 // pred_fallthru
      _
    // Predicated region
    $region18: #{tpu_custom_call.1} parent=1 // pred_check
      _
    $region19: #{tpu_custom_call.1} parent=1 // pred_check_branch
      %387 = sbr.rel (0) target = $region21
    $region20: #{tpu_custom_call.1} parent=1 // pred_region
      %388 = dma.done [#allocation4], 16
    $region21: #{tpu_custom_call.1} parent=1 // pred_fallthru
      _
    %389 = vsyncpa [#allocation3], 1
    %390 = vsyncpa [#allocation4], 1

</llo_original>
